<compile_context>
chip_gen: v6e
topology: v6e:2x2x1
jax: 0.10.0
libtpu: 0.0.40
codegen_flags: <defaults>
</compile_context>

<pallas_src>
import functools

import jax
import jax.numpy as jnp
import numpy as np
from jax.experimental import pallas as pl
from jax.experimental.pallas import tpu as pltpu


# ----------------------------- Pallas kernel ---------------------------------
def _fused_block_kernel(x_ref, mask_ref, w1_ref, s1_ref, b1_ref,
                        w2_ref, s2_ref, b2_ref, o_ref, *, W, L, compute_dtype):
    # x_ref   : (Cin, L)      L = batch_block * H * W, channels-first, lane-dense
    # mask_ref: (8, L)        0/1 boundary masks for the 8 non-center taps (f32)
    # w*_ref  : (Cout, 9*Cin) exact +/-1 binarized taps (compute_dtype)
    # s*_ref  : (Cout, 1)     folded BN scale (f32)
    # b*_ref  : (Cout, 1)     folded BN bias  (f32)
    # o_ref   : (Cout, L)
    x = x_ref[...].astype(jnp.float32)            # residual (and conv1 input)
    masks = mask_ref[...]                         # (8, L) f32, shared by both convs

    def im2col(a):
        # a: (C, L) f32 -> (9*C, L) f32; row tap*C + c = a[c] shifted by tap (kh,kw)
        # with zeros where the source pixel falls outside its own image.
        blocks = []
        m_idx = 0
        for kh in range(3):
            for kw in range(3):
                if kh == 1 and kw == 1:
                    blocks.append(a)              # center tap: no shift, no mask
                    continue
                s = (kh - 1) * W + (kw - 1)       # want out[p] = a[p + s]
                shifted = pltpu.roll(a, (-s) % L, axis=1)
                blocks.append(shifted * masks[m_idx:m_idx + 1, :])
                m_idx += 1
        return jnp.concatenate(blocks, axis=0)    # layout-free: each block = whole vregs

    # conv1 -> bn1 -> relu   (single K = 9*Cin MXU matmul, bf16 operands, f32 acc)
    p1 = im2col(x).astype(compute_dtype)
    h1 = jnp.dot(w1_ref[...], p1, preferred_element_type=jnp.float32)
    h1 = jnp.maximum(h1 * s1_ref[...] + b1_ref[...], 0.0)            # (Cout, L) f32

    # conv2 -> bn2 -> +identity -> relu   (h1 never leaves VMEM/vregs)
    p2 = im2col(h1).astype(compute_dtype)
    h2 = jnp.dot(w2_ref[...], p2, preferred_element_type=jnp.float32)
    o_ref[...] = jnp.maximum(h2 * s2_ref[...] + b2_ref[...] + x, 0.0).astype(o_ref.dtype)


# ----------------------------- parameter glue --------------------------------
def _prep_conv_bn(w_oihw, bn, eps, compute_dtype):
    """OIHW conv weight -> sign-binarized (Cout, 9*Cin) exact +/-1 taps (compute_dtype),
    plus folded BN scale and bias as (Cout, 1) f32 (applied post-matmul)."""
    gamma, beta, rmean, rvar = bn
    cout, cin = w_oihw.shape[0], w_oihw.shape[1]
    # NOTE: torch sign() maps 0 -> 0; we use w >= 0 -> +1 (measure-zero difference).
    w_bin = jnp.where(w_oihw >= 0, 1.0, -1.0)
    w2d = jnp.transpose(w_bin, (0, 2, 3, 1)).reshape(cout, 9 * cin)   # col = tap*Cin + ci
    scale = (gamma / jnp.sqrt(rvar + eps)).astype(jnp.float32)
    bias = (beta - rmean * scale).astype(jnp.float32)
    return w2d.astype(compute_dtype), scale.reshape(cout, 1), bias.reshape(cout, 1)


def _boundary_masks(H, W, batch_block):
    """(8, batch_block*H*W) f32 0/1 masks, one row per non-center 3x3 tap."""
    p = np.arange(H * W)
    h, w = p // W, p % W
    rows = []
    for kh in range(3):
        for kw in range(3):
            if kh == 1 and kw == 1:
                continue
            hh, ww = h + kh - 1, w + kw - 1
            rows.append((hh >= 0) & (hh < H) & (ww >= 0) & (ww < W))
    m = np.stack(rows).astype(np.float32)             # (8, HW)
    m = np.tile(m, (1, batch_block))                  # (8, B*HW)
    return jnp.asarray(m)


# ----------------------------------- wrapper ----------------------------------
def binary_basic_block(x_nchw, w1_oihw, bn1, w2_oihw, bn2, *,
                       batch_block=None, compute_dtype=jnp.bfloat16, eps=1e-5):
    """Forward of BinaryBasicBlock (stride=1, downsample=None).  NCHW in/out."""
    N, C, H, W = x_nchw.shape
    HW = H * W
    Cout = w1_oihw.shape[0]
    assert w2_oihw.shape[0] == Cout == C, "stride=1/downsample=None path needs Cin == Cout"
    assert C % 8 == 0, "channel count must be a multiple of 8 (sublane tile)"
    assert HW % 128 == 0, "H*W must be a multiple of 128 (lane tile)"

    if batch_block is None:
        # Largest divisor of N keeping the lane extent modest (fits vregs/VMEM easily,
        # still fattens the matmul and amortizes per-grid-step overhead).
        batch_block = 1
        for d in range(1, N + 1):
            if N % d == 0 and d * HW <= 8192:
                batch_block = d
    assert N % batch_block == 0
    L = batch_block * HW
    grid = (N // batch_block,)

    # channels-first, batch+spatial flattened along lanes: (C, N*H*W)
    x_cl = jnp.transpose(x_nchw.reshape(N, C, HW), (1, 0, 2)).reshape(C, N * HW)

    masks = _boundary_masks(H, W, batch_block)
    w1, s1, b1 = _prep_conv_bn(w1_oihw, bn1, eps, compute_dtype)
    w2, s2, b2 = _prep_conv_bn(w2_oihw, bn2, eps, compute_dtype)

    kernel = functools.partial(_fused_block_kernel, W=W, L=L, compute_dtype=compute_dtype)

    out = pl.pallas_call(
        kernel,
        out_shape=jax.ShapeDtypeStruct((Cout, N * HW), x_nchw.dtype),
        grid=grid,
        in_specs=[
            pl.BlockSpec((C, L), lambda g: (0, g)),            # activations
            pl.BlockSpec((8, L), lambda g: (0, 0)),            # boundary masks
            pl.BlockSpec((Cout, 9 * C), lambda g: (0, 0)),     # w1 (+/-1, bf16)
            pl.BlockSpec((Cout, 1), lambda g: (0, 0)),         # bn1 scale
            pl.BlockSpec((Cout, 1), lambda g: (0, 0)),         # bn1 bias
            pl.BlockSpec((Cout, 9 * C), lambda g: (0, 0)),     # w2
            pl.BlockSpec((Cout, 1), lambda g: (0, 0)),         # bn2 scale
            pl.BlockSpec((Cout, 1), lambda g: (0, 0)),         # bn2 bias
        ],
        out_specs=pl.BlockSpec((Cout, L), lambda g: (0, g)),
        compiler_params=pltpu.CompilerParams(dimension_semantics=("parallel",)),
    )(x_cl, masks, w1, s1, b1, w2, s2, b2)

    return out.reshape(Cout, N, HW).transpose(1, 0, 2).reshape(N, Cout, H, W)


# ----------------------------- references (pure JAX) ---------------------------
def _ref_block(x, w1, bn1, w2, bn2, eps=1e-5, conv_dtype=jnp.float32):
    """Reference forward. conv_dtype=bf16 mirrors the kernel's MXU numerics exactly
    (exact +/-1 weights, bf16 activations, f32 accumulation, f32 BN/residual)."""
    def bconv(h, w):
        wb = jnp.where(w >= 0, 1.0, -1.0).astype(conv_dtype)
        return jax.lax.conv_general_dilated(
            h.astype(conv_dtype), wb, window_strides=(1, 1), padding=((1, 1), (1, 1)),
            dimension_numbers=("NCHW", "OIHW", "NCHW"),
            preferred_element_type=jnp.float32,
            precision=jax.lax.Precision.HIGHEST)

    def bn(h, params):
        g, b, m, v = params
        s = g / jnp.sqrt(v + eps)
        return h * s[None, :, None, None] + (b - m * s)[None, :, None, None]

    out = jnp.maximum(bn(bconv(x, w1), bn1), 0.0)
    out = jnp.maximum(bn(bconv(out, w2), bn2) + x, 0.0)
    return out


# ----------------------------------- main -------------------------------------
if __name__ == "__main__":
    N, C, H, W = 2, 8, 16, 16     # inplanes = planes = 8, stride = 1, downsample = None
    key = jax.random.PRNGKey(0)
    kx, kw1, kw2, kb1, kb2 = jax.random.split(key, 5)

    x = jax.random.normal(kx, (N, C, H, W), jnp.float32)              # PyTorch NCHW input
    w1 = 0.1 * jax.random.normal(kw1, (C, C, 3, 3), jnp.float32)      # OIHW
    w2 = 0.1 * jax.random.normal(kw2, (C, C, 3, 3), jnp.float32)

    def make_bn(k, c):
        k1, k2, k3, k4 = jax.random.split(k, 4)
        gamma = 0.5 + jax.random.uniform(k1, (c,), jnp.float32)
        beta = 0.1 * jax.random.normal(k2, (c,), jnp.float32)
        rmean = 0.1 * jax.random.normal(k3, (c,), jnp.float32)
        rvar = 0.5 + jax.random.uniform(k4, (c,), jnp.float32)
        return gamma, beta, rmean, rvar

    bn1 = make_bn(kb1, C)
    bn2 = make_bn(kb2, C)

    out = jax.block_until_ready(binary_basic_block(x, w1, bn1, w2, bn2))
    assert out.shape == (N, C, H, W)

    # Tight check vs. a reference that mirrors the kernel's bf16-MXU numerics.
    ref_bf16 = jax.block_until_ready(_ref_block(x, w1, bn1, w2, bn2, conv_dtype=jnp.bfloat16))
    np.testing.assert_allclose(np.asarray(out), np.asarray(ref_bf16), rtol=2e-2, atol=1e-1)

    # Loose semantic sanity check vs. the pure-f32 reference of the module.
    ref_f32 = jax.block_until_ready(_ref_block(x, w1, bn1, w2, bn2, conv_dtype=jnp.float32))
    np.testing.assert_allclose(np.asarray(out), np.asarray(ref_f32), rtol=1e-1, atol=2.5)

    print("KERNEL_OK")
</pallas_src>

<mosaic_0001>
module attributes {stable_mosaic.version = 11 : i64} {
  func.func @_fused_block_kernel(%arg0: i32, %arg1: memref<8x512xf32, #tpu.memory_space<vmem>>, %arg2: memref<8x512xf32, #tpu.memory_space<vmem>>, %arg3: memref<8x72xbf16, #tpu.memory_space<vmem>>, %arg4: memref<8x1xf32, #tpu.memory_space<vmem>>, %arg5: memref<8x1xf32, #tpu.memory_space<vmem>>, %arg6: memref<8x72xbf16, #tpu.memory_space<vmem>>, %arg7: memref<8x1xf32, #tpu.memory_space<vmem>>, %arg8: memref<8x1xf32, #tpu.memory_space<vmem>>, %arg9: memref<8x512xf32, #tpu.memory_space<vmem>>) attributes {dimension_semantics = [#tpu.dimension_semantics<parallel>], iteration_bounds = array<i64: 1>, scalar_prefetch = 0 : i64, scratch_operands = 0 : i64, tpu.core_type = #tpu.core_type<tc>, window_params = [{transform_indices = @transform_0, window_bounds = array<i64: 8, 512>}, {pipeline_mode = #tpu.pipeline_mode<synchronous>, transform_indices = @transform_1, window_bounds = array<i64: 8, 512>}, {pipeline_mode = #tpu.pipeline_mode<synchronous>, transform_indices = @transform_2, window_bounds = array<i64: 8, 72>}, {pipeline_mode = #tpu.pipeline_mode<synchronous>, transform_indices = @transform_3, window_bounds = array<i64: 8, 1>}, {pipeline_mode = #tpu.pipeline_mode<synchronous>, transform_indices = @transform_4, window_bounds = array<i64: 8, 1>}, {pipeline_mode = #tpu.pipeline_mode<synchronous>, transform_indices = @transform_5, window_bounds = array<i64: 8, 72>}, {pipeline_mode = #tpu.pipeline_mode<synchronous>, transform_indices = @transform_6, window_bounds = array<i64: 8, 1>}, {pipeline_mode = #tpu.pipeline_mode<synchronous>, transform_indices = @transform_7, window_bounds = array<i64: 8, 1>}, {transform_indices = @transform_8, window_bounds = array<i64: 8, 512>}]} {
    %c0 = arith.constant 0 : index
    %c0_0 = arith.constant 0 : index
    %0 = vector.load %arg1[%c0, %c0_0] : memref<8x512xf32, #tpu.memory_space<vmem>>, vector<8x512xf32>
    %c0_1 = arith.constant 0 : index
    %c0_2 = arith.constant 0 : index
    %1 = vector.load %arg2[%c0_1, %c0_2] : memref<8x512xf32, #tpu.memory_space<vmem>>, vector<8x512xf32>
    %c17_i32 = arith.constant 17 : i32
    %2 = tpu.dynamic_rotate %0 by %c17_i32 dim 1 : vector<8x512xf32>, i32 -> vector<8x512xf32>
    %3 = vector.extract_strided_slice %1 {offsets = [0, 0], sizes = [1, 512], strides = [1, 1]} : vector<8x512xf32> to vector<1x512xf32>
    %4 = vector.broadcast %3 : vector<1x512xf32> to vector<8x512xf32>
    %5 = arith.mulf %2, %4 : vector<8x512xf32>
    %c16_i32 = arith.constant 16 : i32
    %6 = tpu.dynamic_rotate %0 by %c16_i32 dim 1 : vector<8x512xf32>, i32 -> vector<8x512xf32>
    %7 = vector.extract_strided_slice %1 {offsets = [1, 0], sizes = [1, 512], strides = [1, 1]} : vector<8x512xf32> to vector<1x512xf32>
    %8 = vector.broadcast %7 : vector<1x512xf32> to vector<8x512xf32>
    %9 = arith.mulf %6, %8 : vector<8x512xf32>
    %c15_i32 = arith.constant 15 : i32
    %10 = tpu.dynamic_rotate %0 by %c15_i32 dim 1 : vector<8x512xf32>, i32 -> vector<8x512xf32>
    %11 = vector.extract_strided_slice %1 {offsets = [2, 0], sizes = [1, 512], strides = [1, 1]} : vector<8x512xf32> to vector<1x512xf32>
    %12 = vector.broadcast %11 : vector<1x512xf32> to vector<8x512xf32>
    %13 = arith.mulf %10, %12 : vector<8x512xf32>
    %c1_i32 = arith.constant 1 : i32
    %14 = tpu.dynamic_rotate %0 by %c1_i32 dim 1 : vector<8x512xf32>, i32 -> vector<8x512xf32>
    %15 = vector.extract_strided_slice %1 {offsets = [3, 0], sizes = [1, 512], strides = [1, 1]} : vector<8x512xf32> to vector<1x512xf32>
    %16 = vector.broadcast %15 : vector<1x512xf32> to vector<8x512xf32>
    %17 = arith.mulf %14, %16 : vector<8x512xf32>
    %c511_i32 = arith.constant 511 : i32
    %18 = tpu.dynamic_rotate %0 by %c511_i32 dim 1 : vector<8x512xf32>, i32 -> vector<8x512xf32>
    %19 = vector.extract_strided_slice %1 {offsets = [4, 0], sizes = [1, 512], strides = [1, 1]} : vector<8x512xf32> to vector<1x512xf32>
    %20 = vector.broadcast %19 : vector<1x512xf32> to vector<8x512xf32>
    %21 = arith.mulf %18, %20 : vector<8x512xf32>
    %c497_i32 = arith.constant 497 : i32
    %22 = tpu.dynamic_rotate %0 by %c497_i32 dim 1 : vector<8x512xf32>, i32 -> vector<8x512xf32>
    %23 = vector.extract_strided_slice %1 {offsets = [5, 0], sizes = [1, 512], strides = [1, 1]} : vector<8x512xf32> to vector<1x512xf32>
    %24 = vector.broadcast %23 : vector<1x512xf32> to vector<8x512xf32>
    %25 = arith.mulf %22, %24 : vector<8x512xf32>
    %c496_i32 = arith.constant 496 : i32
    %26 = tpu.dynamic_rotate %0 by %c496_i32 dim 1 : vector<8x512xf32>, i32 -> vector<8x512xf32>
    %27 = vector.extract_strided_slice %1 {offsets = [6, 0], sizes = [1, 512], strides = [1, 1]} : vector<8x512xf32> to vector<1x512xf32>
    %28 = vector.broadcast %27 : vector<1x512xf32> to vector<8x512xf32>
    %29 = arith.mulf %26, %28 : vector<8x512xf32>
    %c495_i32 = arith.constant 495 : i32
    %30 = tpu.dynamic_rotate %0 by %c495_i32 dim 1 : vector<8x512xf32>, i32 -> vector<8x512xf32>
    %31 = vector.extract_strided_slice %1 {offsets = [7, 0], sizes = [1, 512], strides = [1, 1]} : vector<8x512xf32> to vector<1x512xf32>
    %32 = vector.broadcast %31 : vector<1x512xf32> to vector<8x512xf32>
    %33 = arith.mulf %30, %32 : vector<8x512xf32>
    %34 = tpu.concatenate %5, %9, %13, %17, %0, %21, %25, %29, %33 in 0 : vector<8x512xf32>, vector<8x512xf32>, vector<8x512xf32>, vector<8x512xf32>, vector<8x512xf32>, vector<8x512xf32>, vector<8x512xf32>, vector<8x512xf32>, vector<8x512xf32> -> vector<72x512xf32>
    %35 = arith.truncf %34 : vector<72x512xf32> to vector<72x512xbf16>
    %c0_3 = arith.constant 0 : index
    %c0_4 = arith.constant 0 : index
    %36 = vector.load %arg3[%c0_3, %c0_4] : memref<8x72xbf16, #tpu.memory_space<vmem>>, vector<8x72xbf16>
    %cst = arith.constant dense<0.000000e+00> : vector<8x512xf32>
    %37 = tpu.matmul %36, %35, %cst {dimension_numbers = #tpu.dot_dimension_numbers<[1], [0], [0], [1], [0, 0, 1, 1], [], []>} : vector<8x72xbf16>, vector<72x512xbf16>, vector<8x512xf32> -> vector<8x512xf32>
    %c0_5 = arith.constant 0 : index
    %c0_6 = arith.constant 0 : index
    %38 = vector.load %arg4[%c0_5, %c0_6] : memref<8x1xf32, #tpu.memory_space<vmem>>, vector<8x1xf32>
    %39 = vector.broadcast %38 : vector<8x1xf32> to vector<8x512xf32>
    %40 = arith.mulf %37, %39 : vector<8x512xf32>
    %c0_7 = arith.constant 0 : index
    %c0_8 = arith.constant 0 : index
    %41 = vector.load %arg5[%c0_7, %c0_8] : memref<8x1xf32, #tpu.memory_space<vmem>>, vector<8x1xf32>
    %42 = vector.broadcast %41 : vector<8x1xf32> to vector<8x512xf32>
    %43 = arith.addf %40, %42 : vector<8x512xf32>
    %cst_9 = arith.constant 0.000000e+00 : f32
    %44 = vector.broadcast %cst_9 : f32 to vector<8x512xf32>
    %45 = arith.maximumf %43, %44 : vector<8x512xf32>
    %c17_i32_10 = arith.constant 17 : i32
    %46 = tpu.dynamic_rotate %45 by %c17_i32_10 dim 1 : vector<8x512xf32>, i32 -> vector<8x512xf32>
    %47 = vector.extract_strided_slice %1 {offsets = [0, 0], sizes = [1, 512], strides = [1, 1]} : vector<8x512xf32> to vector<1x512xf32>
    %48 = vector.broadcast %47 : vector<1x512xf32> to vector<8x512xf32>
    %49 = arith.mulf %46, %48 : vector<8x512xf32>
    %c16_i32_11 = arith.constant 16 : i32
    %50 = tpu.dynamic_rotate %45 by %c16_i32_11 dim 1 : vector<8x512xf32>, i32 -> vector<8x512xf32>
    %51 = vector.extract_strided_slice %1 {offsets = [1, 0], sizes = [1, 512], strides = [1, 1]} : vector<8x512xf32> to vector<1x512xf32>
    %52 = vector.broadcast %51 : vector<1x512xf32> to vector<8x512xf32>
    %53 = arith.mulf %50, %52 : vector<8x512xf32>
    %c15_i32_12 = arith.constant 15 : i32
    %54 = tpu.dynamic_rotate %45 by %c15_i32_12 dim 1 : vector<8x512xf32>, i32 -> vector<8x512xf32>
    %55 = vector.extract_strided_slice %1 {offsets = [2, 0], sizes = [1, 512], strides = [1, 1]} : vector<8x512xf32> to vector<1x512xf32>
    %56 = vector.broadcast %55 : vector<1x512xf32> to vector<8x512xf32>
    %57 = arith.mulf %54, %56 : vector<8x512xf32>
    %c1_i32_13 = arith.constant 1 : i32
    %58 = tpu.dynamic_rotate %45 by %c1_i32_13 dim 1 : vector<8x512xf32>, i32 -> vector<8x512xf32>
    %59 = vector.extract_strided_slice %1 {offsets = [3, 0], sizes = [1, 512], strides = [1, 1]} : vector<8x512xf32> to vector<1x512xf32>
    %60 = vector.broadcast %59 : vector<1x512xf32> to vector<8x512xf32>
    %61 = arith.mulf %58, %60 : vector<8x512xf32>
    %c511_i32_14 = arith.constant 511 : i32
    %62 = tpu.dynamic_rotate %45 by %c511_i32_14 dim 1 : vector<8x512xf32>, i32 -> vector<8x512xf32>
    %63 = vector.extract_strided_slice %1 {offsets = [4, 0], sizes = [1, 512], strides = [1, 1]} : vector<8x512xf32> to vector<1x512xf32>
    %64 = vector.broadcast %63 : vector<1x512xf32> to vector<8x512xf32>
    %65 = arith.mulf %62, %64 : vector<8x512xf32>
    %c497_i32_15 = arith.constant 497 : i32
    %66 = tpu.dynamic_rotate %45 by %c497_i32_15 dim 1 : vector<8x512xf32>, i32 -> vector<8x512xf32>
    %67 = vector.extract_strided_slice %1 {offsets = [5, 0], sizes = [1, 512], strides = [1, 1]} : vector<8x512xf32> to vector<1x512xf32>
    %68 = vector.broadcast %67 : vector<1x512xf32> to vector<8x512xf32>
    %69 = arith.mulf %66, %68 : vector<8x512xf32>
    %c496_i32_16 = arith.constant 496 : i32
    %70 = tpu.dynamic_rotate %45 by %c496_i32_16 dim 1 : vector<8x512xf32>, i32 -> vector<8x512xf32>
    %71 = vector.extract_strided_slice %1 {offsets = [6, 0], sizes = [1, 512], strides = [1, 1]} : vector<8x512xf32> to vector<1x512xf32>
    %72 = vector.broadcast %71 : vector<1x512xf32> to vector<8x512xf32>
    %73 = arith.mulf %70, %72 : vector<8x512xf32>
    %c495_i32_17 = arith.constant 495 : i32
    %74 = tpu.dynamic_rotate %45 by %c495_i32_17 dim 1 : vector<8x512xf32>, i32 -> vector<8x512xf32>
    %75 = vector.extract_strided_slice %1 {offsets = [7, 0], sizes = [1, 512], strides = [1, 1]} : vector<8x512xf32> to vector<1x512xf32>
    %76 = vector.broadcast %75 : vector<1x512xf32> to vector<8x512xf32>
    %77 = arith.mulf %74, %76 : vector<8x512xf32>
    %78 = tpu.concatenate %49, %53, %57, %61, %45, %65, %69, %73, %77 in 0 : vector<8x512xf32>, vector<8x512xf32>, vector<8x512xf32>, vector<8x512xf32>, vector<8x512xf32>, vector<8x512xf32>, vector<8x512xf32>, vector<8x512xf32>, vector<8x512xf32> -> vector<72x512xf32>
    %79 = arith.truncf %78 : vector<72x512xf32> to vector<72x512xbf16>
    %c0_18 = arith.constant 0 : index
    %c0_19 = arith.constant 0 : index
    %80 = vector.load %arg6[%c0_18, %c0_19] : memref<8x72xbf16, #tpu.memory_space<vmem>>, vector<8x72xbf16>
    %cst_20 = arith.constant dense<0.000000e+00> : vector<8x512xf32>
    %81 = tpu.matmul %80, %79, %cst_20 {dimension_numbers = #tpu.dot_dimension_numbers<[1], [0], [0], [1], [0, 0, 1, 1], [], []>} : vector<8x72xbf16>, vector<72x512xbf16>, vector<8x512xf32> -> vector<8x512xf32>
    %c0_21 = arith.constant 0 : index
    %c0_22 = arith.constant 0 : index
    %82 = vector.load %arg7[%c0_21, %c0_22] : memref<8x1xf32, #tpu.memory_space<vmem>>, vector<8x1xf32>
    %83 = vector.broadcast %82 : vector<8x1xf32> to vector<8x512xf32>
    %84 = arith.mulf %81, %83 : vector<8x512xf32>
    %c0_23 = arith.constant 0 : index
    %c0_24 = arith.constant 0 : index
    %85 = vector.load %arg8[%c0_23, %c0_24] : memref<8x1xf32, #tpu.memory_space<vmem>>, vector<8x1xf32>
    %86 = vector.broadcast %85 : vector<8x1xf32> to vector<8x512xf32>
    %87 = arith.addf %84, %86 : vector<8x512xf32>
    %88 = arith.addf %87, %0 : vector<8x512xf32>
    %cst_25 = arith.constant 0.000000e+00 : f32
    %89 = vector.broadcast %cst_25 : f32 to vector<8x512xf32>
    %90 = arith.maximumf %88, %89 : vector<8x512xf32>
    %c0_26 = arith.constant 0 : index
    %c0_27 = arith.constant 0 : index
    %91 = vector.load %arg9[%c0_26, %c0_27] : memref<8x512xf32, #tpu.memory_space<vmem>>, vector<8x512xf32>
    tpu.vector_store %arg9[%c0_26, %c0_27], %90 {strides = array<i32>} : memref<8x512xf32, #tpu.memory_space<vmem>>, vector<8x512xf32>,
    return
  }
  func.func @transform_0(%arg0: i32) -> (i32, i32) {
    %c0_i32 = arith.constant 0 : i32
    %c0_i32_0 = arith.constant 0 : i32
    return %c0_i32, %arg0 : i32, i32
  }
  func.func @transform_1(%arg0: i32) -> (i32, i32) {
    %c0_i32 = arith.constant 0 : i32
    %c0_i32_0 = arith.constant 0 : i32
    %c0_i32_1 = arith.constant 0 : i32
    return %c0_i32, %c0_i32_0 : i32, i32
  }
  func.func @transform_2(%arg0: i32) -> (i32, i32) {
    %c0_i32 = arith.constant 0 : i32
    %c0_i32_0 = arith.constant 0 : i32
    %c0_i32_1 = arith.constant 0 : i32
    return %c0_i32, %c0_i32_0 : i32, i32
  }
  func.func @transform_3(%arg0: i32) -> (i32, i32) {
    %c0_i32 = arith.constant 0 : i32
    %c0_i32_0 = arith.constant 0 : i32
    %c0_i32_1 = arith.constant 0 : i32
    return %c0_i32, %c0_i32_0 : i32, i32
  }
  func.func @transform_4(%arg0: i32) -> (i32, i32) {
    %c0_i32 = arith.constant 0 : i32
    %c0_i32_0 = arith.constant 0 : i32
    %c0_i32_1 = arith.constant 0 : i32
    return %c0_i32, %c0_i32_0 : i32, i32
  }
  func.func @transform_5(%arg0: i32) -> (i32, i32) {
    %c0_i32 = arith.constant 0 : i32
    %c0_i32_0 = arith.constant 0 : i32
    %c0_i32_1 = arith.constant 0 : i32
    return %c0_i32, %c0_i32_0 : i32, i32
  }
  func.func @transform_6(%arg0: i32) -> (i32, i32) {
    %c0_i32 = arith.constant 0 : i32
    %c0_i32_0 = arith.constant 0 : i32
    %c0_i32_1 = arith.constant 0 : i32
    return %c0_i32, %c0_i32_0 : i32, i32
  }
  func.func @transform_7(%arg0: i32) -> (i32, i32) {
    %c0_i32 = arith.constant 0 : i32
    %c0_i32_0 = arith.constant 0 : i32
    %c0_i32_1 = arith.constant 0 : i32
    return %c0_i32, %c0_i32_0 : i32, i32
  }
  func.func @transform_8(%arg0: i32) -> (i32, i32) {
    %c0_i32 = arith.constant 0 : i32
    %c0_i32_0 = arith.constant 0 : i32
    return %c0_i32, %arg0 : i32, i32
  }
}

</mosaic_0001>

<llo_original>
// kernel: tpu_custom_call.1
$region0: #{tpu_custom_call.1}
  #allocation0 [shape = 'u32[]', space=smem, size = 0x4, offset = 0x4, fixed_abs, tag = 'smem constant byte address 0x4 - core index']
  #allocation1 [shape = 'u32[144,128]{1,0:T(1,128)}', space=vmem, size = 0x12000, scoped, tag = 'internal scratch']
  %s0 = inlined_call_operand.vmem [shape: f32[8,512], index: 0, kind: input, shape index: {}]
  %s1 = inlined_call_operand.hbm [shape: f32[8,512], index: 1, kind: input, shape index: {}]
  %s2 = inlined_call_operand.vmem [shape: bf16[8,72], index: 2, kind: input, shape index: {}]
  %s3 = inlined_call_operand.vmem [shape: f32[8,1], index: 3, kind: input, shape index: {}]
  %s4 = inlined_call_operand.vmem [shape: f32[8,1], index: 4, kind: input, shape index: {}]
  %s5 = inlined_call_operand.vmem [shape: bf16[8,72], index: 5, kind: input, shape index: {}]
  %s6 = inlined_call_operand.vmem [shape: f32[8,1], index: 6, kind: input, shape index: {}]
  %s7 = inlined_call_operand.vmem [shape: f32[8,1], index: 7, kind: input, shape index: {}]
  %s8 = inlined_call_operand.hbm [shape: f32[8,512], index: 8, kind: output, shape index: {}]
  %s9 = sld [smem:[#allocation0]]
  $region46: #{tpu_custom_call.1} parent=0
    _
  %s11 = ssub.s32 1, %s9
  %s12 = scalar_select 0, %s11, %s9
  $region1: #{tpu_custom_call.1} parent=0
    #allocation2 [shape = 'u8[16384]{0}', space=vmem, size = 0x4000, scoped, tag = 'input window, operand 1, single buffered']
    #allocation3 [shape = 's32[1]{0}', space=sflag, size = 0x4, scoped, tag = 'scoped memory for tpu_custom_call.1']
    #allocation4 [shape = 's32[1]{0}', space=sflag, size = 0x4, scoped, tag = 'scoped memory for tpu_custom_call.1']
    #allocation5 [shape = 'u8[16384]{0}', space=vmem, size = 0x4000, scoped, tag = 'output window, operand 0, single buffered']
    %13 = vsyncpa [#allocation3], 0
    %14 = vsyncpa [#allocation4], 0
    // Predicated region
    $region2: #{tpu_custom_call.1} parent=1 // pred_check
      _
    $region3: #{tpu_custom_call.1} parent=1 // pred_check_branch
      %16 = sbr.rel (0) target = $region5
    $region4: #{tpu_custom_call.1} parent=1 // pred_region
      _
    $region5: #{tpu_custom_call.1} parent=1 // pred_fallthru
      _
    // Predicated region
    $region6: #{tpu_custom_call.1} parent=1 // pred_check
      _
    $region7: #{tpu_custom_call.1} parent=1 // pred_check_branch
      %18 = sbr.rel (0) target = $region9
    $region8: #{tpu_custom_call.1} parent=1 // pred_region
      %s20 = ssub.s32 512, 512
      %21 = vsyncadd [#allocation3], %s20
      %s23 = sshll.u32 [#allocation2], 4
      %s24 = int_to_ptr.vmem [resolvable:$true] %s23
      %26 = dma.hbm_to_vmem [thread:$0]  %s1, 512, %s24, [#allocation3]
    $region9: #{tpu_custom_call.1} parent=1 // pred_fallthru
      _
    // Predicated region
    $region10: #{tpu_custom_call.1} parent=1 // pred_check
      _
    $region11: #{tpu_custom_call.1} parent=1 // pred_check_branch
      %28 = sbr.rel (0) target = $region13
    $region12: #{tpu_custom_call.1} parent=1 // pred_region
      _
    $region13: #{tpu_custom_call.1} parent=1 // pred_fallthru
      _
    // Predicated region
    $region14: #{tpu_custom_call.1} parent=1 // pred_check
      _
    $region15: #{tpu_custom_call.1} parent=1 // pred_check_branch
      %30 = sbr.rel (0) target = $region17
    $region16: #{tpu_custom_call.1} parent=1 // pred_region
      _
    $region17: #{tpu_custom_call.1} parent=1 // pred_fallthru
      _
    // Predicated region
    $region18: #{tpu_custom_call.1} parent=1 // pred_check
      _
    $region19: #{tpu_custom_call.1} parent=1 // pred_check_branch
      %32 = sbr.rel (0) target = $region21
    $region20: #{tpu_custom_call.1} parent=1 // pred_region
      _
    $region21: #{tpu_custom_call.1} parent=1 // pred_fallthru
      _
    // Predicated region
    $region22: #{tpu_custom_call.1} parent=1 // pred_check
      _
    $region23: #{tpu_custom_call.1} parent=1 // pred_check_branch
      %34 = sbr.rel (0) target = $region25
    $region24: #{tpu_custom_call.1} parent=1 // pred_region
      _
    $region25: #{tpu_custom_call.1} parent=1 // pred_fallthru
      _
    // Predicated region
    $region26: #{tpu_custom_call.1} parent=1 // pred_check
      _
    $region27: #{tpu_custom_call.1} parent=1 // pred_check_branch
      %36 = sbr.rel (0) target = $region29
    $region28: #{tpu_custom_call.1} parent=1 // pred_region
      _
    $region29: #{tpu_custom_call.1} parent=1 // pred_fallthru
      _
    // Predicated region
    $region30: #{tpu_custom_call.1} parent=1 // pred_check
      _
    $region31: #{tpu_custom_call.1} parent=1 // pred_check_branch
      %38 = sbr.rel (0) target = $region33
    $region32: #{tpu_custom_call.1} parent=1 // pred_region
      _
    $region33: #{tpu_custom_call.1} parent=1 // pred_fallthru
      _
    // Predicated region
    $region34: #{tpu_custom_call.1} parent=1 // pred_check
      _
    $region35: #{tpu_custom_call.1} parent=1 // pred_check_branch
      %40 = sbr.rel (0) target = $region37
    $region36: #{tpu_custom_call.1} parent=1 // pred_region
      %41 = dma.done [#allocation3], 512
    $region37: #{tpu_custom_call.1} parent=1 // pred_fallthru
      _
    %v43 = vld [vmem:[%s0] sm:$0xff]
    %v44 = vld [vmem:[%s0 + $0x8] sm:$0xff]
    %v45 = vld [vmem:[%s0 + $0x10] sm:$0xff]
    %v46 = vld [vmem:[%s0 + $0x18] sm:$0xff]
    %v47 = vld [vmem:[#allocation2] sm:$0xff]
    %v48 = vld [vmem:[#allocation2 + $0x8] sm:$0xff]
    %v49 = vld [vmem:[#allocation2 + $0x10] sm:$0xff]
    %v50 = vld [vmem:[#allocation2 + $0x18] sm:$0xff]
    %51 = vrot.lane.b32.xlu0 %v43, 17
    %v52 = vpop.permute.xlu0 %51
    %53 = vrot.lane.b32.xlu0 %v44, 17
    %v54 = vpop.permute.xlu0 %53
    %55 = vrot.lane.b32.xlu0 %v45, 17
    %v56 = vpop.permute.xlu0 %55
    %57 = vrot.lane.b32.xlu0 %v46, 17
    %v58 = vpop.permute.xlu0 %57
    %v59 = vlaneseq
    %v60 = vand.u32 %v59, 127
    %vm61 = vcmp.lt.s32.totalorder %v60, 17
    %v62 = vsel %vm61, %v56, %v58
    %v63 = vsel %vm61, %v54, %v56
    %v64 = vsel %vm61, %v52, %v54
    %v65 = vsel %vm61, %v58, %v52
    %v66 = vlaneseq
    %v67 = vshrl.u32 %v66, 7
    %v68 = vsub.s32 0, %v67
    %v69 = vrot.slane %v47, %v68
    %v70 = vlaneseq
    %v71 = vshrl.u32 %v70, 7
    %v72 = vsub.s32 0, %v71
    %v73 = vrot.slane %v48, %v72
    %v74 = vlaneseq
    %v75 = vshrl.u32 %v74, 7
    %v76 = vsub.s32 0, %v75
    %v77 = vrot.slane %v49, %v76
    %v78 = vlaneseq
    %v79 = vshrl.u32 %v78, 7
    %v80 = vsub.s32 0, %v79
    %v81 = vrot.slane %v50, %v80
    %v82 = vmul.f32 %v65, %v69
    %v83 = vmul.f32 %v64, %v73
    %v84 = vmul.f32 %v63, %v77
    %v85 = vmul.f32 %v62, %v81
    %86 = vrot.lane.b32.xlu0 %v43, 16
    %v87 = vpop.permute.xlu0 %86
    %88 = vrot.lane.b32.xlu0 %v44, 16
    %v89 = vpop.permute.xlu0 %88
    %90 = vrot.lane.b32.xlu0 %v45, 16
    %v91 = vpop.permute.xlu0 %90
    %92 = vrot.lane.b32.xlu0 %v46, 16
    %v93 = vpop.permute.xlu0 %92
    %vm94 = vcmp.lt.s32.totalorder %v60, 16
    %v95 = vsel %vm94, %v91, %v93
    %v96 = vsel %vm94, %v89, %v91
    %v97 = vsel %vm94, %v87, %v89
    %v98 = vsel %vm94, %v93, %v87
    %v99 = vlaneseq
    %v100 = vshrl.u32 %v99, 7
    %v101 = vsub.s32 1, %v100
    %v102 = vrot.slane %v47, %v101
    %v103 = vlaneseq
    %v104 = vshrl.u32 %v103, 7
    %v105 = vsub.s32 1, %v104
    %v106 = vrot.slane %v48, %v105
    %v107 = vlaneseq
    %v108 = vshrl.u32 %v107, 7
    %v109 = vsub.s32 1, %v108
    %v110 = vrot.slane %v49, %v109
    %v111 = vlaneseq
    %v112 = vshrl.u32 %v111, 7
    %v113 = vsub.s32 1, %v112
    %v114 = vrot.slane %v50, %v113
    %v115 = vmul.f32 %v98, %v102
    %v116 = vmul.f32 %v97, %v106
    %v117 = vmul.f32 %v96, %v110
    %v118 = vmul.f32 %v95, %v114
    %119 = vrot.lane.b32.xlu0 %v43, 15
    %v120 = vpop.permute.xlu0 %119
    %121 = vrot.lane.b32.xlu0 %v44, 15
    %v122 = vpop.permute.xlu0 %121
    %123 = vrot.lane.b32.xlu0 %v45, 15
    %v124 = vpop.permute.xlu0 %123
    %125 = vrot.lane.b32.xlu0 %v46, 15
    %v126 = vpop.permute.xlu0 %125
    %vm127 = vcmp.lt.s32.totalorder %v60, 15
    %v128 = vsel %vm127, %v124, %v126
    %v129 = vsel %vm127, %v122, %v124
    %v130 = vsel %vm127, %v120, %v122
    %v131 = vsel %vm127, %v126, %v120
    %v132 = vlaneseq
    %v133 = vshrl.u32 %v132, 7
    %v134 = vsub.s32 2, %v133
    %v135 = vrot.slane %v47, %v134
    %v136 = vlaneseq
    %v137 = vshrl.u32 %v136, 7
    %v138 = vsub.s32 2, %v137
    %v139 = vrot.slane %v48, %v138
    %v140 = vlaneseq
    %v141 = vshrl.u32 %v140, 7
    %v142 = vsub.s32 2, %v141
    %v143 = vrot.slane %v49, %v142
    %v144 = vlaneseq
    %v145 = vshrl.u32 %v144, 7
    %v146 = vsub.s32 2, %v145
    %v147 = vrot.slane %v50, %v146
    %v148 = vmul.f32 %v131, %v135
    %v149 = vmul.f32 %v130, %v139
    %v150 = vmul.f32 %v129, %v143
    %v151 = vmul.f32 %v128, %v147
    %152 = vrot.lane.b32.xlu0 %v43, 1
    %v153 = vpop.permute.xlu0 %152
    %154 = vrot.lane.b32.xlu0 %v44, 1
    %v155 = vpop.permute.xlu0 %154
    %156 = vrot.lane.b32.xlu0 %v45, 1
    %v157 = vpop.permute.xlu0 %156
    %158 = vrot.lane.b32.xlu0 %v46, 1
    %v159 = vpop.permute.xlu0 %158
    %vm160 = vcmp.lt.s32.totalorder %v60, 1
    %v161 = vsel %vm160, %v157, %v159
    %v162 = vsel %vm160, %v155, %v157
    %v163 = vsel %vm160, %v153, %v155
    %v164 = vsel %vm160, %v159, %v153
    %v165 = vlaneseq
    %v166 = vshrl.u32 %v165, 7
    %v167 = vsub.s32 3, %v166
    %v168 = vrot.slane %v47, %v167
    %v169 = vlaneseq
    %v170 = vshrl.u32 %v169, 7
    %v171 = vsub.s32 3, %v170
    %v172 = vrot.slane %v48, %v171
    %v173 = vlaneseq
    %v174 = vshrl.u32 %v173, 7
    %v175 = vsub.s32 3, %v174
    %v176 = vrot.slane %v49, %v175
    %v177 = vlaneseq
    %v178 = vshrl.u32 %v177, 7
    %v179 = vsub.s32 3, %v178
    %v180 = vrot.slane %v50, %v179
    %v181 = vmul.f32 %v164, %v168
    %v182 = vmul.f32 %v163, %v172
    %v183 = vmul.f32 %v162, %v176
    %v184 = vmul.f32 %v161, %v180
    %185 = vrot.lane.b32.xlu0 %v43, 127
    %v186 = vpop.permute.xlu0 %185
    %187 = vrot.lane.b32.xlu0 %v44, 127
    %v188 = vpop.permute.xlu0 %187
    %189 = vrot.lane.b32.xlu0 %v45, 127
    %v190 = vpop.permute.xlu0 %189
    %191 = vrot.lane.b32.xlu0 %v46, 127
    %v192 = vpop.permute.xlu0 %191
    %vm193 = vcmp.lt.s32.totalorder %v60, 127
    %v194 = vsel %vm193, %v190, %v192
    %v195 = vsel %vm193, %v188, %v190
    %v196 = vsel %vm193, %v186, %v188
    %v197 = vsel %vm193, %v192, %v186
    %v198 = vlaneseq
    %v199 = vshrl.u32 %v198, 7
    %v200 = vsub.s32 4, %v199
    %v201 = vrot.slane %v47, %v200
    %v202 = vlaneseq
    %v203 = vshrl.u32 %v202, 7
    %v204 = vsub.s32 4, %v203
    %v205 = vrot.slane %v48, %v204
    %v206 = vlaneseq
    %v207 = vshrl.u32 %v206, 7
    %v208 = vsub.s32 4, %v207
    %v209 = vrot.slane %v49, %v208
    %v210 = vlaneseq
    %v211 = vshrl.u32 %v210, 7
    %v212 = vsub.s32 4, %v211
    %v213 = vrot.slane %v50, %v212
    %v214 = vmul.f32 %v196, %v201
    %v215 = vmul.f32 %v195, %v205
    %v216 = vmul.f32 %v194, %v209
    %v217 = vmul.f32 %v197, %v213
    %218 = vrot.lane.b32.xlu0 %v43, 113
    %v219 = vpop.permute.xlu0 %218
    %220 = vrot.lane.b32.xlu0 %v44, 113
    %v221 = vpop.permute.xlu0 %220
    %222 = vrot.lane.b32.xlu0 %v45, 113
    %v223 = vpop.permute.xlu0 %222
    %224 = vrot.lane.b32.xlu0 %v46, 113
    %v225 = vpop.permute.xlu0 %224
    %vm226 = vcmp.lt.s32.totalorder %v60, 113
    %v227 = vsel %vm226, %v223, %v225
    %v228 = vsel %vm226, %v221, %v223
    %v229 = vsel %vm226, %v219, %v221
    %v230 = vsel %vm226, %v225, %v219
    %v231 = vlaneseq
    %v232 = vshrl.u32 %v231, 7
    %v233 = vsub.s32 5, %v232
    %v234 = vrot.slane %v47, %v233
    %v235 = vlaneseq
    %v236 = vshrl.u32 %v235, 7
    %v237 = vsub.s32 5, %v236
    %v238 = vrot.slane %v48, %v237
    %v239 = vlaneseq
    %v240 = vshrl.u32 %v239, 7
    %v241 = vsub.s32 5, %v240
    %v242 = vrot.slane %v49, %v241
    %v243 = vlaneseq
    %v244 = vshrl.u32 %v243, 7
    %v245 = vsub.s32 5, %v244
    %v246 = vrot.slane %v50, %v245
    %v247 = vmul.f32 %v229, %v234
    %v248 = vmul.f32 %v228, %v238
    %v249 = vmul.f32 %v227, %v242
    %v250 = vmul.f32 %v230, %v246
    %251 = vrot.lane.b32.xlu0 %v43, 112
    %v252 = vpop.permute.xlu0 %251
    %253 = vrot.lane.b32.xlu0 %v44, 112
    %v254 = vpop.permute.xlu0 %253
    %255 = vrot.lane.b32.xlu0 %v45, 112
    %v256 = vpop.permute.xlu0 %255
    %257 = vrot.lane.b32.xlu0 %v46, 112
    %v258 = vpop.permute.xlu0 %257
    %vm259 = vcmp.lt.s32.totalorder %v60, 112
    %v260 = vsel %vm259, %v256, %v258
    %v261 = vsel %vm259, %v254, %v256
    %v262 = vsel %vm259, %v252, %v254
    %v263 = vsel %vm259, %v258, %v252
    %v264 = vlaneseq
    %v265 = vshrl.u32 %v264, 7
    %v266 = vsub.s32 6, %v265
    %v267 = vrot.slane %v47, %v266
    %v268 = vlaneseq
    %v269 = vshrl.u32 %v268, 7
    %v270 = vsub.s32 6, %v269
    %v271 = vrot.slane %v48, %v270
    %v272 = vlaneseq
    %v273 = vshrl.u32 %v272, 7
    %v274 = vsub.s32 6, %v273
    %v275 = vrot.slane %v49, %v274
    %v276 = vlaneseq
    %v277 = vshrl.u32 %v276, 7
    %v278 = vsub.s32 6, %v277
    %v279 = vrot.slane %v50, %v278
    %v280 = vmul.f32 %v262, %v267
    %v281 = vmul.f32 %v261, %v271
    %v282 = vmul.f32 %v260, %v275
    %v283 = vmul.f32 %v263, %v279
    %284 = vrot.lane.b32.xlu0 %v43, 111
    %v285 = vpop.permute.xlu0 %284
    %286 = vrot.lane.b32.xlu0 %v44, 111
    %v287 = vpop.permute.xlu0 %286
    %288 = vrot.lane.b32.xlu0 %v45, 111
    %v289 = vpop.permute.xlu0 %288
    %290 = vrot.lane.b32.xlu0 %v46, 111
    %v291 = vpop.permute.xlu0 %290
    %vm292 = vcmp.lt.s32.totalorder %v60, 111
    %v293 = vsel %vm292, %v289, %v291
    %v294 = vsel %vm292, %v287, %v289
    %v295 = vsel %vm292, %v285, %v287
    %v296 = vsel %vm292, %v291, %v285
    %v297 = vlaneseq
    %v298 = vshrl.u32 %v297, 7
    %v299 = vsub.s32 7, %v298
    %v300 = vrot.slane %v47, %v299
    %v301 = vlaneseq
    %v302 = vshrl.u32 %v301, 7
    %v303 = vsub.s32 7, %v302
    %v304 = vrot.slane %v48, %v303
    %v305 = vlaneseq
    %v306 = vshrl.u32 %v305, 7
    %v307 = vsub.s32 7, %v306
    %v308 = vrot.slane %v49, %v307
    %v309 = vlaneseq
    %v310 = vshrl.u32 %v309, 7
    %v311 = vsub.s32 7, %v310
    %v312 = vrot.slane %v50, %v311
    %v313 = vmul.f32 %v295, %v300
    %v314 = vmul.f32 %v294, %v304
    %v315 = vmul.f32 %v293, %v308
    %v316 = vmul.f32 %v296, %v312
    %v317 = vpack.c.bf16 %v115, %v82
    %v318 = vpack.c.bf16 %v116, %v83
    %v319 = vpack.c.bf16 %v117, %v84
    %v320 = vpack.c.bf16 %v118, %v85
    %v321 = vpack.c.bf16 %v181, %v148
    %v322 = vpack.c.bf16 %v182, %v149
    %v323 = vpack.c.bf16 %v183, %v150
    %v324 = vpack.c.bf16 %v184, %v151
    %v325 = vpack.c.bf16 %v214, %v43
    %v326 = vpack.c.bf16 %v215, %v44
    %v327 = vpack.c.bf16 %v216, %v45
    %v328 = vpack.c.bf16 %v217, %v46
    %v329 = vpack.c.bf16 %v280, %v247
    %v330 = vpack.c.bf16 %v281, %v248
    %v331 = vpack.c.bf16 %v282, %v249
    %v332 = vpack.c.bf16 %v283, %v250
    %v333 = vpack.c.bf16 %v313, %v313
    %v334 = vpack.c.bf16 %v314, %v314
    %v335 = vpack.c.bf16 %v315, %v315
    %v336 = vpack.c.bf16 %v316, %v316
    %v337 = vld [vmem:[%s2] sm:$0xf]
    %vm338 = vcmask 588800
    %v340 = vsel %vm338, %v337, 0
    %vm342 = vcmask 1043456
    %v344 = vsel %vm342, %v333, 0
    %v347 = vsel %vm342, %v334, 0
    %v350 = vsel %vm342, %v335, 0
    %v353 = vsel %vm342, %v336, 0
    %355 = vmatprep.subr.bf16.mxu0 0
    %356 = vmatpush1.bf16.msra.mxu0 0
    %357 = vmatprep.subr.bf16.mxu0 0
    %358 = vmatpush1.bf16.msra.mxu0 0
    %359 = vmatprep.subr.bf16.mxu0 0
    %360 = vmatpush1.bf16.msra.mxu0 0
    %361 = vmatprep.subr.bf16.mxu0 %v347
    %362 = vmatpush1.bf16.msra.mxu0 %v344
    %363 = vmatprep.subr.bf16.mxu0 %v330
    %364 = vmatpush1.bf16.msra.mxu0 %v329
    %365 = vmatprep.subr.bf16.mxu0 %v326
    %366 = vmatpush1.bf16.msra.mxu0 %v325
    %367 = vmatprep.subr.bf16.mxu0 %v322
    %368 = vmatpush1.bf16.msra.mxu0 %v321
    %369 = vmatprep.subr.bf16.mxu0 %v318
    %370 = vmatpush1.bf16.msra.mxu0 %v317
    %371 = vmatprep.subr.bf16.mxu0 0
    %372 = vmatpush2.bf16.msra.mxu0 0
    %373 = vmatprep.subr.bf16.mxu0 0
    %374 = vmatpush2.bf16.msra.mxu0 0
    %375 = vmatprep.subr.bf16.mxu0 0
    %376 = vmatpush2.bf16.msra.mxu0 0
    %377 = vmatprep.subr.bf16.mxu0 0
    %378 = vmatpush2.bf16.msra.mxu0 0
    %379 = vmatprep.subr.bf16.mxu0 0
    %380 = vmatpush2.bf16.msra.mxu0 0
    %381 = vmatprep.subr.bf16.mxu0 0
    %382 = vmatpush2.bf16.msra.mxu0 0
    %383 = vmatprep.subr.bf16.mxu0 0
    %384 = vmatpush2.bf16.msra.mxu0 0
    %385 = vmatprep.subr.bf16.mxu0 0
    %386 = vmatpush2.bf16.msra.mxu0 0
    %387 = vmatprep.mubr.bf16.mxu0 0
    %388 = vmatmul.mubr.bf16.gmra.mxu0 %v340
    %v389 = vpop.f32.mrf.mxu0
    %v390 = vadd.f32 0.0, %v389
    %v391 = vpop.f32.mrf.mxu0
    %v392 = vadd.f32 0.0, %v391
    %v393 = vpop.f32.mrf.mxu0
    %v394 = vpop.f32.mrf.mxu0
    %395 = vdwg.mxu0
    %396 = vmatprep.subr.bf16.mxu0 0
    %397 = vmatpush1.bf16.msra.mxu0 0
    %398 = vmatprep.subr.bf16.mxu0 0
    %399 = vmatpush1.bf16.msra.mxu0 0
    %400 = vmatprep.subr.bf16.mxu0 0
    %401 = vmatpush1.bf16.msra.mxu0 0
    %402 = vmatprep.subr.bf16.mxu0 %v353
    %403 = vmatpush1.bf16.msra.mxu0 %v350
    %404 = vmatprep.subr.bf16.mxu0 %v332
    %405 = vmatpush1.bf16.msra.mxu0 %v331
    %406 = vmatprep.subr.bf16.mxu0 %v328
    %407 = vmatpush1.bf16.msra.mxu0 %v327
    %408 = vmatprep.subr.bf16.mxu0 %v324
    %409 = vmatpush1.bf16.msra.mxu0 %v323
    %410 = vmatprep.subr.bf16.mxu0 %v320
    %411 = vmatpush1.bf16.msra.mxu0 %v319
    %412 = vmatprep.subr.bf16.mxu0 0
    %413 = vmatpush2.bf16.msra.mxu0 0
    %414 = vmatprep.subr.bf16.mxu0 0
    %415 = vmatpush2.bf16.msra.mxu0 0
    %416 = vmatprep.subr.bf16.mxu0 0
    %417 = vmatpush2.bf16.msra.mxu0 0
    %418 = vmatprep.subr.bf16.mxu0 0
    %419 = vmatpush2.bf16.msra.mxu0 0
    %420 = vmatprep.subr.bf16.mxu0 0
    %421 = vmatpush2.bf16.msra.mxu0 0
    %422 = vmatprep.subr.bf16.mxu0 0
    %423 = vmatpush2.bf16.msra.mxu0 0
    %424 = vmatprep.subr.bf16.mxu0 0
    %425 = vmatpush2.bf16.msra.mxu0 0
    %426 = vmatprep.subr.bf16.mxu0 0
    %427 = vmatpush2.bf16.msra.mxu0 0
    %428 = vmatprep.mubr.bf16.mxu0 0
    %429 = vmatmul.mubr.bf16.gmra.mxu0 %v340
    %v430 = vpop.f32.mrf.mxu0
    %v431 = vadd.f32 0.0, %v430
    %v432 = vpop.f32.mrf.mxu0
    %v433 = vadd.f32 0.0, %v432
    %v434 = vpop.f32.mrf.mxu0
    %v435 = vpop.f32.mrf.mxu0
    %436 = vdwg.mxu0
    %v437 = vld [vmem:[%s3] sm:$0xff]
    %439 = vset.pattern.permute.xlu0 0
    %440 = vperm.xlu0 %439, %v437
    %v441 = vpop.permute.xlu0 %440
    %v443 = vmul.f32 %v390, %v441
    %v444 = vmul.f32 %v392, %v441
    %v445 = vmul.f32 %v431, %v441
    %v446 = vmul.f32 %v433, %v441
    %v447 = vld [vmem:[%s4] sm:$0xff]
    %449 = vset.pattern.permute.xlu0 0
    %450 = vperm.xlu0 %449, %v447
    %v451 = vpop.permute.xlu0 %450
    %v453 = vadd.f32 %v443, %v451
    %v454 = vadd.f32 %v444, %v451
    %v455 = vadd.f32 %v445, %v451
    %v456 = vadd.f32 %v446, %v451
    %v457 = vmax.f32 %v453, 0.0
    %v458 = vmax.f32 %v454, 0.0
    %v459 = vmax.f32 %v455, 0.0
    %v460 = vmax.f32 %v456, 0.0
    %461 = vrot.lane.b32.xlu0 %v457, 17
    %v462 = vpop.permute.xlu0 %461
    %463 = vrot.lane.b32.xlu0 %v458, 17
    %v464 = vpop.permute.xlu0 %463
    %465 = vrot.lane.b32.xlu0 %v459, 17
    %v466 = vpop.permute.xlu0 %465
    %467 = vrot.lane.b32.xlu0 %v460, 17
    %v468 = vpop.permute.xlu0 %467
    %v469 = vsel %vm61, %v466, %v468
    %v470 = vsel %vm61, %v464, %v466
    %v471 = vsel %vm61, %v462, %v464
    %v472 = vsel %vm61, %v468, %v462
    %v473 = vmul.f32 %v472, %v69
    %v474 = vmul.f32 %v471, %v73
    %v475 = vmul.f32 %v470, %v77
    %v476 = vmul.f32 %v469, %v81
    %477 = vrot.lane.b32.xlu0 %v457, 16
    %v478 = vpop.permute.xlu0 %477
    %479 = vrot.lane.b32.xlu0 %v458, 16
    %v480 = vpop.permute.xlu0 %479
    %481 = vrot.lane.b32.xlu0 %v459, 16
    %v482 = vpop.permute.xlu0 %481
    %483 = vrot.lane.b32.xlu0 %v460, 16
    %v484 = vpop.permute.xlu0 %483
    %v485 = vsel %vm94, %v482, %v484
    %v486 = vsel %vm94, %v480, %v482
    %v487 = vsel %vm94, %v478, %v480
    %v488 = vsel %vm94, %v484, %v478
    %v489 = vmul.f32 %v488, %v102
    %v490 = vmul.f32 %v487, %v106
    %v491 = vmul.f32 %v486, %v110
    %v492 = vmul.f32 %v485, %v114
    %493 = vrot.lane.b32.xlu0 %v457, 15
    %v494 = vpop.permute.xlu0 %493
    %495 = vrot.lane.b32.xlu0 %v458, 15
    %v496 = vpop.permute.xlu0 %495
    %497 = vrot.lane.b32.xlu0 %v459, 15
    %v498 = vpop.permute.xlu0 %497
    %499 = vrot.lane.b32.xlu0 %v460, 15
    %v500 = vpop.permute.xlu0 %499
    %v501 = vsel %vm127, %v498, %v500
    %v502 = vsel %vm127, %v496, %v498
    %v503 = vsel %vm127, %v494, %v496
    %v504 = vsel %vm127, %v500, %v494
    %v505 = vmul.f32 %v504, %v135
    %v506 = vmul.f32 %v503, %v139
    %v507 = vmul.f32 %v502, %v143
    %v508 = vmul.f32 %v501, %v147
    %509 = vrot.lane.b32.xlu0 %v457, 1
    %v510 = vpop.permute.xlu0 %509
    %511 = vrot.lane.b32.xlu0 %v458, 1
    %v512 = vpop.permute.xlu0 %511
    %513 = vrot.lane.b32.xlu0 %v459, 1
    %v514 = vpop.permute.xlu0 %513
    %515 = vrot.lane.b32.xlu0 %v460, 1
    %v516 = vpop.permute.xlu0 %515
    %v517 = vsel %vm160, %v514, %v516
    %v518 = vsel %vm160, %v512, %v514
    %v519 = vsel %vm160, %v510, %v512
    %v520 = vsel %vm160, %v516, %v510
    %v521 = vmul.f32 %v520, %v168
    %v522 = vmul.f32 %v519, %v172
    %v523 = vmul.f32 %v518, %v176
    %v524 = vmul.f32 %v517, %v180
    %525 = vrot.lane.b32.xlu0 %v457, 127
    %v526 = vpop.permute.xlu0 %525
    %527 = vrot.lane.b32.xlu0 %v458, 127
    %v528 = vpop.permute.xlu0 %527
    %529 = vrot.lane.b32.xlu0 %v459, 127
    %v530 = vpop.permute.xlu0 %529
    %531 = vrot.lane.b32.xlu0 %v460, 127
    %v532 = vpop.permute.xlu0 %531
    %v533 = vsel %vm193, %v530, %v532
    %v534 = vsel %vm193, %v528, %v530
    %v535 = vsel %vm193, %v526, %v528
    %v536 = vsel %vm193, %v532, %v526
    %v537 = vmul.f32 %v535, %v201
    %v538 = vmul.f32 %v534, %v205
    %v539 = vmul.f32 %v533, %v209
    %v540 = vmul.f32 %v536, %v213
    %541 = vrot.lane.b32.xlu0 %v457, 113
    %v542 = vpop.permute.xlu0 %541
    %543 = vrot.lane.b32.xlu0 %v458, 113
    %v544 = vpop.permute.xlu0 %543
    %545 = vrot.lane.b32.xlu0 %v459, 113
    %v546 = vpop.permute.xlu0 %545
    %547 = vrot.lane.b32.xlu0 %v460, 113
    %v548 = vpop.permute.xlu0 %547
    %v549 = vsel %vm226, %v546, %v548
    %v550 = vsel %vm226, %v544, %v546
    %v551 = vsel %vm226, %v542, %v544
    %v552 = vsel %vm226, %v548, %v542
    %v553 = vmul.f32 %v551, %v234
    %v554 = vmul.f32 %v550, %v238
    %v555 = vmul.f32 %v549, %v242
    %v556 = vmul.f32 %v552, %v246
    %557 = vrot.lane.b32.xlu0 %v457, 112
    %v558 = vpop.permute.xlu0 %557
    %559 = vrot.lane.b32.xlu0 %v458, 112
    %v560 = vpop.permute.xlu0 %559
    %561 = vrot.lane.b32.xlu0 %v459, 112
    %v562 = vpop.permute.xlu0 %561
    %563 = vrot.lane.b32.xlu0 %v460, 112
    %v564 = vpop.permute.xlu0 %563
    %v565 = vsel %vm259, %v562, %v564
    %v566 = vsel %vm259, %v560, %v562
    %v567 = vsel %vm259, %v558, %v560
    %v568 = vsel %vm259, %v564, %v558
    %v569 = vmul.f32 %v567, %v267
    %v570 = vmul.f32 %v566, %v271
    %v571 = vmul.f32 %v565, %v275
    %v572 = vmul.f32 %v568, %v279
    %573 = vrot.lane.b32.xlu0 %v457, 111
    %v574 = vpop.permute.xlu0 %573
    %575 = vrot.lane.b32.xlu0 %v458, 111
    %v576 = vpop.permute.xlu0 %575
    %577 = vrot.lane.b32.xlu0 %v459, 111
    %v578 = vpop.permute.xlu0 %577
    %579 = vrot.lane.b32.xlu0 %v460, 111
    %v580 = vpop.permute.xlu0 %579
    %v581 = vsel %vm292, %v578, %v580
    %v582 = vsel %vm292, %v576, %v578
    %v583 = vsel %vm292, %v574, %v576
    %v584 = vsel %vm292, %v580, %v574
    %v585 = vmul.f32 %v583, %v300
    %v586 = vmul.f32 %v582, %v304
    %v587 = vmul.f32 %v581, %v308
    %v588 = vmul.f32 %v584, %v312
    %v589 = vpack.c.bf16 %v489, %v473
    %v590 = vpack.c.bf16 %v490, %v474
    %v591 = vpack.c.bf16 %v491, %v475
    %v592 = vpack.c.bf16 %v492, %v476
    %v593 = vpack.c.bf16 %v521, %v505
    %v594 = vpack.c.bf16 %v522, %v506
    %v595 = vpack.c.bf16 %v523, %v507
    %v596 = vpack.c.bf16 %v524, %v508
    %v597 = vpack.c.bf16 %v537, %v457
    %v598 = vpack.c.bf16 %v538, %v458
    %v599 = vpack.c.bf16 %v539, %v459
    %v600 = vpack.c.bf16 %v540, %v460
    %v601 = vpack.c.bf16 %v569, %v553
    %v602 = vpack.c.bf16 %v570, %v554
    %v603 = vpack.c.bf16 %v571, %v555
    %v604 = vpack.c.bf16 %v572, %v556
    %v605 = vpack.c.bf16 %v585, %v585
    %v606 = vpack.c.bf16 %v586, %v586
    %v607 = vpack.c.bf16 %v587, %v587
    %v608 = vpack.c.bf16 %v588, %v588
    %v609 = vld [vmem:[%s5] sm:$0xf]
    %v611 = vsel %vm338, %v609, 0
    %v614 = vsel %vm342, %v605, 0
    %v617 = vsel %vm342, %v606, 0
    %v620 = vsel %vm342, %v607, 0
    %v623 = vsel %vm342, %v608, 0
    %625 = vmatprep.subr.bf16.mxu0 0
    %626 = vmatpush1.bf16.msra.mxu0 0
    %627 = vmatprep.subr.bf16.mxu0 0
    %628 = vmatpush1.bf16.msra.mxu0 0
    %629 = vmatprep.subr.bf16.mxu0 0
    %630 = vmatpush1.bf16.msra.mxu0 0
    %631 = vmatprep.subr.bf16.mxu0 %v617
    %632 = vmatpush1.bf16.msra.mxu0 %v614
    %633 = vmatprep.subr.bf16.mxu0 %v602
    %634 = vmatpush1.bf16.msra.mxu0 %v601
    %635 = vmatprep.subr.bf16.mxu0 %v598
    %636 = vmatpush1.bf16.msra.mxu0 %v597
    %637 = vmatprep.subr.bf16.mxu0 %v594
    %638 = vmatpush1.bf16.msra.mxu0 %v593
    %639 = vmatprep.subr.bf16.mxu0 %v590
    %640 = vmatpush1.bf16.msra.mxu0 %v589
    %641 = vmatprep.subr.bf16.mxu0 0
    %642 = vmatpush2.bf16.msra.mxu0 0
    %643 = vmatprep.subr.bf16.mxu0 0
    %644 = vmatpush2.bf16.msra.mxu0 0
    %645 = vmatprep.subr.bf16.mxu0 0
    %646 = vmatpush2.bf16.msra.mxu0 0
    %647 = vmatprep.subr.bf16.mxu0 0
    %648 = vmatpush2.bf16.msra.mxu0 0
    %649 = vmatprep.subr.bf16.mxu0 0
    %650 = vmatpush2.bf16.msra.mxu0 0
    %651 = vmatprep.subr.bf16.mxu0 0
    %652 = vmatpush2.bf16.msra.mxu0 0
    %653 = vmatprep.subr.bf16.mxu0 0
    %654 = vmatpush2.bf16.msra.mxu0 0
    %655 = vmatprep.subr.bf16.mxu0 0
    %656 = vmatpush2.bf16.msra.mxu0 0
    %657 = vmatprep.mubr.bf16.mxu0 0
    %658 = vmatmul.mubr.bf16.gmra.mxu0 %v611
    %v659 = vpop.f32.mrf.mxu0
    %v660 = vadd.f32 0.0, %v659
    %v661 = vpop.f32.mrf.mxu0
    %v662 = vadd.f32 0.0, %v661
    %v663 = vpop.f32.mrf.mxu0
    %v664 = vpop.f32.mrf.mxu0
    %665 = vdwg.mxu0
    %666 = vmatprep.subr.bf16.mxu0 0
    %667 = vmatpush1.bf16.msra.mxu0 0
    %668 = vmatprep.subr.bf16.mxu0 0
    %669 = vmatpush1.bf16.msra.mxu0 0
    %670 = vmatprep.subr.bf16.mxu0 0
    %671 = vmatpush1.bf16.msra.mxu0 0
    %672 = vmatprep.subr.bf16.mxu0 %v623
    %673 = vmatpush1.bf16.msra.mxu0 %v620
    %674 = vmatprep.subr.bf16.mxu0 %v604
    %675 = vmatpush1.bf16.msra.mxu0 %v603
    %676 = vmatprep.subr.bf16.mxu0 %v600
    %677 = vmatpush1.bf16.msra.mxu0 %v599
    %678 = vmatprep.subr.bf16.mxu0 %v596
    %679 = vmatpush1.bf16.msra.mxu0 %v595
    %680 = vmatprep.subr.bf16.mxu0 %v592
    %681 = vmatpush1.bf16.msra.mxu0 %v591
    %682 = vmatprep.subr.bf16.mxu0 0
    %683 = vmatpush2.bf16.msra.mxu0 0
    %684 = vmatprep.subr.bf16.mxu0 0
    %685 = vmatpush2.bf16.msra.mxu0 0
    %686 = vmatprep.subr.bf16.mxu0 0
    %687 = vmatpush2.bf16.msra.mxu0 0
    %688 = vmatprep.subr.bf16.mxu0 0
    %689 = vmatpush2.bf16.msra.mxu0 0
    %690 = vmatprep.subr.bf16.mxu0 0
    %691 = vmatpush2.bf16.msra.mxu0 0
    %692 = vmatprep.subr.bf16.mxu0 0
    %693 = vmatpush2.bf16.msra.mxu0 0
    %694 = vmatprep.subr.bf16.mxu0 0
    %695 = vmatpush2.bf16.msra.mxu0 0
    %696 = vmatprep.subr.bf16.mxu0 0
    %697 = vmatpush2.bf16.msra.mxu0 0
    %698 = vmatprep.mubr.bf16.mxu0 0
    %699 = vmatmul.mubr.bf16.gmra.mxu0 %v611
    %v700 = vpop.f32.mrf.mxu0
    %v701 = vadd.f32 0.0, %v700
    %v702 = vpop.f32.mrf.mxu0
    %v703 = vadd.f32 0.0, %v702
    %v704 = vpop.f32.mrf.mxu0
    %v705 = vpop.f32.mrf.mxu0
    %706 = vdwg.mxu0
    %v707 = vld [vmem:[%s6] sm:$0xff]
    %709 = vset.pattern.permute.xlu0 0
    %710 = vperm.xlu0 %709, %v707
    %v711 = vpop.permute.xlu0 %710
    %v713 = vmul.f32 %v660, %v711
    %v714 = vmul.f32 %v662, %v711
    %v715 = vmul.f32 %v701, %v711
    %v716 = vmul.f32 %v703, %v711
    %v717 = vld [vmem:[%s7] sm:$0xff]
    %719 = vset.pattern.permute.xlu0 0
    %720 = vperm.xlu0 %719, %v717
    %v721 = vpop.permute.xlu0 %720
    %v723 = vadd.f32 %v713, %v721
    %v724 = vadd.f32 %v714, %v721
    %v725 = vadd.f32 %v715, %v721
    %v726 = vadd.f32 %v716, %v721
    %v727 = vadd.f32 %v723, %v43
    %v728 = vadd.f32 %v724, %v44
    %v729 = vadd.f32 %v725, %v45
    %v730 = vadd.f32 %v726, %v46
    %v731 = vmax.f32 %v727, 0.0
    %v732 = vmax.f32 %v728, 0.0
    %v733 = vmax.f32 %v729, 0.0
    %v734 = vmax.f32 %v730, 0.0
    %735 = vst [vmem:[#allocation5] sm:$0xff] %v731
    %736 = vst [vmem:[#allocation5 + $0x8] sm:$0xff] %v732
    %737 = vst [vmem:[#allocation5 + $0x10] sm:$0xff] %v733
    %738 = vst [vmem:[#allocation5 + $0x18] sm:$0xff] %v734
    // Predicated region
    $region38: #{tpu_custom_call.1} parent=1 // pred_check
      _
    $region39: #{tpu_custom_call.1} parent=1 // pred_check_branch
      %740 = sbr.rel (0) target = $region41
    $region40: #{tpu_custom_call.1} parent=1 // pred_region
      %s742 = ssub.s32 512, 512
      %743 = vsyncadd [#allocation4], %s742
      %s745 = sshll.u32 [#allocation5], 4
      %s746 = int_to_ptr.vmem [resolvable:$true] %s745
      %748 = dma.vmem_to_hbm [thread:$0]  %s746, 512, %s8, [#allocation4]
    $region41: #{tpu_custom_call.1} parent=1 // pred_fallthru
      _
    // Predicated region
    $region42: #{tpu_custom_call.1} parent=1 // pred_check
      _
    $region43: #{tpu_custom_call.1} parent=1 // pred_check_branch
      %750 = sbr.rel (0) target = $region45
    $region44: #{tpu_custom_call.1} parent=1 // pred_region
      %751 = dma.done [#allocation4], 512
    $region45: #{tpu_custom_call.1} parent=1 // pred_fallthru
      _
    %752 = vsyncpa [#allocation3], 1
    %753 = vsyncpa [#allocation4], 1

</llo_original>
